<compile_context>
chip_gen: v6e
topology: v6e:2x2x1
jax: 0.10.0
libtpu: 0.0.40
codegen_flags: <defaults>
</compile_context>

<pallas_src>
import jax
import jax.numpy as jnp
from jax.experimental import pallas as pl
from jax.experimental.pallas import tpu as pltpu


def _round_up(x, m):
    return ((x + m - 1) // m) * m


def actor_kernel(xT_ref, w1T_ref, b1T_ref, whT_ref, bhT_ref, out_ref):
    # Shared trunk: Linear + ReLU, batch on lanes.
    xT = xT_ref[...]                                                      # (F, TB)
    h = jnp.dot(w1T_ref[...], xT, preferred_element_type=jnp.float32)     # (N, TB)
    h = jnp.maximum(h + b1T_ref[...], 0.0)                                # bias bcast over lanes

    # Fused heads: one (2, N) @ (N, TB) matmul -> row 0 = mu-logit, row 1 = sigma-logit.
    z = jnp.dot(whT_ref[...], h, preferred_element_type=jnp.float32) + bhT_ref[...]  # (2, TB)

    z_mu = z[0:1, :]
    z_sg = z[1:2, :]
    out_ref[0:1, :] = 2.0 * jnp.tanh(z_mu)
    # numerically stable softplus, matches torch.nn.functional.softplus (beta=1)
    out_ref[1:2, :] = jnp.maximum(z_sg, 0.0) + jnp.log1p(jnp.exp(-jnp.abs(z_sg)))


def actor_forward(x, params, *, tile_b=None):
    """x: (B, n_features) f32. params: dict of f32 arrays (see init_actor_params).

    Returns (mu, sigma), each (B, 1) f32.
    """
    B, F = x.shape
    w1, b1 = params["w1"], params["b1"]                                   # (F, N), (1, N)
    N = w1.shape[1]

    # Transposed / fused parameter views for the batch-in-lanes kernel.
    w1T = w1.T                                                            # (N, F)
    b1T = b1.T                                                            # (N, 1)
    whT = jnp.concatenate([params["w_mu"].T, params["w_sigma"].T], axis=0)  # (2, N)
    bhT = jnp.concatenate([params["b_mu"].T, params["b_sigma"].T], axis=0)  # (2, 1)

    # Batch tile selection (batch sits on the lane axis -> multiples of 128).
    B128 = max(128, _round_up(B, 128))
    if tile_b is None:
        tile_b = min(B128, 8192)
        if B128 >= 256:
            # At least two grid steps so v7x's 2 TensorCores both get work.
            tile_b = min(tile_b, _round_up(pl.cdiv(B128, 2), 128))
    else:
        tile_b = max(128, _round_up(int(tile_b), 128))

    n_tiles = pl.cdiv(B128, tile_b)
    Bp = n_tiles * tile_b

    # Pad batch, then transpose so batch -> lanes.
    if Bp != B:
        x = jnp.pad(x, ((0, Bp - B), (0, 0)))
    xT = x.T                                                              # (F, Bp)

    out = pl.pallas_call(
        actor_kernel,
        out_shape=jax.ShapeDtypeStruct((2, Bp), jnp.float32),
        grid=(n_tiles,),
        in_specs=[
            pl.BlockSpec((F, tile_b), lambda i: (0, i)),   # x streams over batch (lanes)
            pl.BlockSpec((N, F), lambda i: (0, 0)),        # trunk weight, VMEM-resident
            pl.BlockSpec((N, 1), lambda i: (0, 0)),        # trunk bias
            pl.BlockSpec((2, N), lambda i: (0, 0)),        # fused head weight
            pl.BlockSpec((2, 1), lambda i: (0, 0)),        # fused head bias
        ],
        out_specs=pl.BlockSpec((2, tile_b), lambda i: (0, i)),
        compiler_params=pltpu.CompilerParams(
            dimension_semantics=("parallel",),             # lets v7x split batch across its 2 TCs
        ),
    )(xT, w1T, b1T, whT, bhT)

    out = out[:, :B]                                                      # (2, B)
    mu = out[0:1, :].T                                                    # (B, 1)
    sigma = out[1:2, :].T                                                 # (B, 1)
    return mu, sigma


def init_actor_params(key, n_features, n_neuron):
    """Deterministic init mimicking PyTorch nn.Linear default (uniform +/- 1/sqrt(fan_in)).
    Weights are stored as (in_features, out_features), i.e. PyTorch (out, in) transposed."""
    k = jax.random.split(key, 6)

    def lin(kw, kb, fan_in, fan_out):
        bound = 1.0 / jnp.sqrt(fan_in)
        w = jax.random.uniform(kw, (fan_in, fan_out), jnp.float32, -bound, bound)
        b = jax.random.uniform(kb, (1, fan_out), jnp.float32, -bound, bound)
        return w, b

    w1, b1 = lin(k[0], k[1], n_features, n_neuron)
    w_mu, b_mu = lin(k[2], k[3], n_neuron, 1)
    w_sg, b_sg = lin(k[4], k[5], n_neuron, 1)
    return {"w1": w1, "b1": b1, "w_mu": w_mu, "b_mu": b_mu,
            "w_sigma": w_sg, "b_sigma": b_sg}


def actor_reference(x, params):
    """Pure-JAX reference of the PyTorch forward."""
    h = jnp.maximum(x @ params["w1"] + params["b1"], 0.0)
    mu = 2.0 * jnp.tanh(h @ params["w_mu"] + params["b_mu"])
    sigma = jax.nn.softplus(h @ params["w_sigma"] + params["b_sigma"])
    return mu, sigma


if __name__ == "__main__":
    n_features, n_neuron = 4, 32

    key = jax.random.PRNGKey(0)
    kx, kp, kx2 = jax.random.split(key, 3)
    params = init_actor_params(kp, n_features, n_neuron)

    # Small-batch case (single 128-lane block, grid of 1).
    batch = 8
    x = jax.random.normal(kx, (batch, n_features), jnp.float32)
    mu, sigma = actor_forward(x, params)
    jax.block_until_ready((mu, sigma))
    mu_ref, sigma_ref = actor_reference(x, params)
    assert mu.shape == (batch, 1) and sigma.shape == (batch, 1)
    assert jnp.allclose(mu, mu_ref, atol=1e-5), "mu mismatch vs reference (small batch)"
    assert jnp.allclose(sigma, sigma_ref, atol=1e-5), "sigma mismatch vs reference (small batch)"

    # Larger, non-tile-multiple batch exercises the tiled/padded path
    # (caller tile_b is rounded up to a lane multiple defensively).
    batch2 = 600
    x2 = jax.random.normal(kx2, (batch2, n_features), jnp.float32)
    mu2, sigma2 = actor_forward(x2, params, tile_b=256)
    jax.block_until_ready((mu2, sigma2))
    mu2_ref, sigma2_ref = actor_reference(x2, params)
    assert mu2.shape == (batch2, 1) and sigma2.shape == (batch2, 1)
    assert jnp.allclose(mu2, mu2_ref, atol=1e-5), "mu mismatch vs reference (tiled batch)"
    assert jnp.allclose(sigma2, sigma2_ref, atol=1e-5), "sigma mismatch vs reference (tiled batch)"

    # Default tile selection path on a large batch (>= 2 grid steps for v7x).
    batch3 = 5000
    x3 = jax.random.normal(kx, (batch3, n_features), jnp.float32)
    mu3, sigma3 = actor_forward(x3, params)
    jax.block_until_ready((mu3, sigma3))
    mu3_ref, sigma3_ref = actor_reference(x3, params)
    assert jnp.allclose(mu3, mu3_ref, atol=1e-5), "mu mismatch vs reference (large batch)"
    assert jnp.allclose(sigma3, sigma3_ref, atol=1e-5), "sigma mismatch vs reference (large batch)"

    print("KERNEL_OK")
</pallas_src>

<mosaic_0001>
module attributes {stable_mosaic.version = 11 : i64} {
  func.func @actor_kernel(%arg0: i32, %arg1: memref<4x128xf32, #tpu.memory_space<vmem>>, %arg2: memref<32x4xf32, #tpu.memory_space<vmem>>, %arg3: memref<32x1xf32, #tpu.memory_space<vmem>>, %arg4: memref<2x32xf32, #tpu.memory_space<vmem>>, %arg5: memref<2x1xf32, #tpu.memory_space<vmem>>, %arg6: memref<2x128xf32, #tpu.memory_space<vmem>>) attributes {dimension_semantics = [#tpu.dimension_semantics<parallel>], iteration_bounds = array<i64: 1>, scalar_prefetch = 0 : i64, scratch_operands = 0 : i64, tpu.core_type = #tpu.core_type<tc>, window_params = [{transform_indices = @transform_0, window_bounds = array<i64: 4, 128>}, {pipeline_mode = #tpu.pipeline_mode<synchronous>, transform_indices = @transform_1, window_bounds = array<i64: 32, 4>}, {pipeline_mode = #tpu.pipeline_mode<synchronous>, transform_indices = @transform_2, window_bounds = array<i64: 32, 1>}, {pipeline_mode = #tpu.pipeline_mode<synchronous>, transform_indices = @transform_3, window_bounds = array<i64: 2, 32>}, {pipeline_mode = #tpu.pipeline_mode<synchronous>, transform_indices = @transform_4, window_bounds = array<i64: 2, 1>}, {transform_indices = @transform_5, window_bounds = array<i64: 2, 128>}]} {
    %c0 = arith.constant 0 : index
    %c0_0 = arith.constant 0 : index
    %0 = vector.load %arg1[%c0, %c0_0] : memref<4x128xf32, #tpu.memory_space<vmem>>, vector<4x128xf32>
    %c0_1 = arith.constant 0 : index
    %c0_2 = arith.constant 0 : index
    %1 = vector.load %arg2[%c0_1, %c0_2] : memref<32x4xf32, #tpu.memory_space<vmem>>, vector<32x4xf32>
    %cst = arith.constant dense<0.000000e+00> : vector<32x128xf32>
    %2 = tpu.matmul %1, %0, %cst {dimension_numbers = #tpu.dot_dimension_numbers<[1], [0], [0], [1], [0, 0, 1, 1], [], []>} : vector<32x4xf32>, vector<4x128xf32>, vector<32x128xf32> -> vector<32x128xf32>
    %c0_3 = arith.constant 0 : index
    %c0_4 = arith.constant 0 : index
    %3 = vector.load %arg3[%c0_3, %c0_4] : memref<32x1xf32, #tpu.memory_space<vmem>>, vector<32x1xf32>
    %4 = vector.broadcast %3 : vector<32x1xf32> to vector<32x128xf32>
    %5 = arith.addf %2, %4 : vector<32x128xf32>
    %cst_5 = arith.constant 0.000000e+00 : f32
    %6 = vector.broadcast %cst_5 : f32 to vector<32x128xf32>
    %7 = arith.maximumf %5, %6 : vector<32x128xf32>
    %c0_6 = arith.constant 0 : index
    %c0_7 = arith.constant 0 : index
    %8 = vector.load %arg4[%c0_6, %c0_7] : memref<2x32xf32, #tpu.memory_space<vmem>>, vector<2x32xf32>
    %cst_8 = arith.constant dense<0.000000e+00> : vector<2x128xf32>
    %9 = tpu.matmul %8, %7, %cst_8 {dimension_numbers = #tpu.dot_dimension_numbers<[1], [0], [0], [1], [0, 0, 1, 1], [], []>} : vector<2x32xf32>, vector<32x128xf32>, vector<2x128xf32> -> vector<2x128xf32>
    %c0_9 = arith.constant 0 : index
    %c0_10 = arith.constant 0 : index
    %10 = vector.load %arg5[%c0_9, %c0_10] : memref<2x1xf32, #tpu.memory_space<vmem>>, vector<2x1xf32>
    %11 = vector.broadcast %10 : vector<2x1xf32> to vector<2x128xf32>
    %12 = arith.addf %9, %11 : vector<2x128xf32>
    %13 = vector.extract_strided_slice %12 {offsets = [0, 0], sizes = [1, 128], strides = [1, 1]} : vector<2x128xf32> to vector<1x128xf32>
    %14 = vector.extract_strided_slice %12 {offsets = [1, 0], sizes = [1, 128], strides = [1, 1]} : vector<2x128xf32> to vector<1x128xf32>
    %15 = math.tanh %13 : vector<1x128xf32>
    %cst_11 = arith.constant 2.000000e+00 : f32
    %16 = vector.broadcast %cst_11 : f32 to vector<1x128xf32>
    %17 = arith.mulf %16, %15 : vector<1x128xf32>
    %c0_12 = arith.constant 0 : index
    %c0_13 = arith.constant 0 : index
    %18 = vector.load %arg6[%c0_12, %c0_13] : memref<2x128xf32, #tpu.memory_space<vmem>>, vector<1x128xf32>
    tpu.vector_store %arg6[%c0_12, %c0_13], %17 {strides = array<i32>} : memref<2x128xf32, #tpu.memory_space<vmem>>, vector<1x128xf32>,
    %cst_14 = arith.constant 0.000000e+00 : f32
    %19 = vector.broadcast %cst_14 : f32 to vector<1x128xf32>
    %20 = arith.maximumf %14, %19 : vector<1x128xf32>
    %21 = math.absf %14 : vector<1x128xf32>
    %cst_15 = arith.constant 0.000000e+00 : f32
    %22 = vector.broadcast %cst_15 : f32 to vector<1x128xf32>
    %23 = arith.subf %22, %21 : vector<1x128xf32>
    %24 = math.exp %23 : vector<1x128xf32>
    %25 = math.log1p %24 : vector<1x128xf32>
    %26 = arith.addf %20, %25 : vector<1x128xf32>
    %c1 = arith.constant 1 : index
    %c0_16 = arith.constant 0 : index
    %27 = vector.load %arg6[%c1, %c0_16] : memref<2x128xf32, #tpu.memory_space<vmem>>, vector<1x128xf32>
    tpu.vector_store %arg6[%c1, %c0_16], %26 {strides = array<i32>} : memref<2x128xf32, #tpu.memory_space<vmem>>, vector<1x128xf32>,
    return
  }
  func.func @transform_0(%arg0: i32) -> (i32, i32) {
    %c0_i32 = arith.constant 0 : i32
    %c0_i32_0 = arith.constant 0 : i32
    return %c0_i32, %arg0 : i32, i32
  }
  func.func @transform_1(%arg0: i32) -> (i32, i32) {
    %c0_i32 = arith.constant 0 : i32
    %c0_i32_0 = arith.constant 0 : i32
    %c0_i32_1 = arith.constant 0 : i32
    return %c0_i32, %c0_i32_0 : i32, i32
  }
  func.func @transform_2(%arg0: i32) -> (i32, i32) {
    %c0_i32 = arith.constant 0 : i32
    %c0_i32_0 = arith.constant 0 : i32
    %c0_i32_1 = arith.constant 0 : i32
    return %c0_i32, %c0_i32_0 : i32, i32
  }
  func.func @transform_3(%arg0: i32) -> (i32, i32) {
    %c0_i32 = arith.constant 0 : i32
    %c0_i32_0 = arith.constant 0 : i32
    %c0_i32_1 = arith.constant 0 : i32
    return %c0_i32, %c0_i32_0 : i32, i32
  }
  func.func @transform_4(%arg0: i32) -> (i32, i32) {
    %c0_i32 = arith.constant 0 : i32
    %c0_i32_0 = arith.constant 0 : i32
    %c0_i32_1 = arith.constant 0 : i32
    return %c0_i32, %c0_i32_0 : i32, i32
  }
  func.func @transform_5(%arg0: i32) -> (i32, i32) {
    %c0_i32 = arith.constant 0 : i32
    %c0_i32_0 = arith.constant 0 : i32
    return %c0_i32, %arg0 : i32, i32
  }
}

</mosaic_0001>

<llo_original>
// kernel: tpu_custom_call.1
$region0: #{tpu_custom_call.1}
  #allocation0 [shape = 'u32[]', space=smem, size = 0x4, offset = 0x4, fixed_abs, tag = 'smem constant byte address 0x4 - core index']
  #allocation1 [shape = 'u32[144,128]{1,0:T(1,128)}', space=vmem, size = 0x12000, scoped, tag = 'internal scratch']
  %s0 = inlined_call_operand.vmem [shape: f32[4,128], index: 0, kind: input, shape index: {}]
  %s1 = inlined_call_operand.vmem [shape: f32[32,4], index: 1, kind: input, shape index: {}]
  %s2 = inlined_call_operand.vmem [shape: f32[32,1], index: 2, kind: input, shape index: {}]
  %s3 = inlined_call_operand.vmem [shape: f32[2,32], index: 3, kind: input, shape index: {}]
  %s4 = inlined_call_operand.vmem [shape: f32[2,1], index: 4, kind: input, shape index: {}]
  %s5 = inlined_call_operand.hbm [shape: f32[2,128], index: 5, kind: output, shape index: {}]
  %s6 = sld [smem:[#allocation0]]
  $region30: #{tpu_custom_call.1} parent=0
    _
  %s8 = ssub.s32 1, %s6
  %s9 = scalar_select 0, %s8, %s6
  $region1: #{tpu_custom_call.1} parent=0
    #allocation2 [shape = 'u8[1024]{0}', space=vmem, size = 0x400, scoped, tag = 'output window, operand 0, single buffered']
    #allocation3 [shape = 's32[1]{0}', space=sflag, size = 0x4, scoped, tag = 'scoped memory for tpu_custom_call.1']
    %10 = vsyncpa [#allocation3], 0
    // Predicated region
    $region2: #{tpu_custom_call.1} parent=1 // pred_check
      _
    $region3: #{tpu_custom_call.1} parent=1 // pred_check_branch
      %12 = sbr.rel (0) target = $region5
    $region4: #{tpu_custom_call.1} parent=1 // pred_region
      _
    $region5: #{tpu_custom_call.1} parent=1 // pred_fallthru
      _
    // Predicated region
    $region6: #{tpu_custom_call.1} parent=1 // pred_check
      _
    $region7: #{tpu_custom_call.1} parent=1 // pred_check_branch
      %14 = sbr.rel (0) target = $region9
    $region8: #{tpu_custom_call.1} parent=1 // pred_region
      _
    $region9: #{tpu_custom_call.1} parent=1 // pred_fallthru
      _
    // Predicated region
    $region10: #{tpu_custom_call.1} parent=1 // pred_check
      _
    $region11: #{tpu_custom_call.1} parent=1 // pred_check_branch
      %16 = sbr.rel (0) target = $region13
    $region12: #{tpu_custom_call.1} parent=1 // pred_region
      _
    $region13: #{tpu_custom_call.1} parent=1 // pred_fallthru
      _
    // Predicated region
    $region14: #{tpu_custom_call.1} parent=1 // pred_check
      _
    $region15: #{tpu_custom_call.1} parent=1 // pred_check_branch
      %18 = sbr.rel (0) target = $region17
    $region16: #{tpu_custom_call.1} parent=1 // pred_region
      _
    $region17: #{tpu_custom_call.1} parent=1 // pred_fallthru
      _
    // Predicated region
    $region18: #{tpu_custom_call.1} parent=1 // pred_check
      _
    $region19: #{tpu_custom_call.1} parent=1 // pred_check_branch
      %20 = sbr.rel (0) target = $region21
    $region20: #{tpu_custom_call.1} parent=1 // pred_region
      _
    $region21: #{tpu_custom_call.1} parent=1 // pred_fallthru
      _
    %v21 = vld [vmem:[%s0] sm:$0xf]
    %v22 = vld [vmem:[%s1] sm:$0xff]
    %v23 = vld [vmem:[%s1 + $0x8] sm:$0xff]
    %v24 = vld [vmem:[%s1 + $0x10] sm:$0xff]
    %v25 = vld [vmem:[%s1 + $0x18] sm:$0xff]
    %v26 = vld [vmem:[%s2] sm:$0xff]
    %v27 = vld [vmem:[%s2 + $0x8] sm:$0xff]
    %v28 = vld [vmem:[%s2 + $0x10] sm:$0xff]
    %v29 = vld [vmem:[%s2 + $0x18] sm:$0xff]
    %31 = vset.pattern.permute.xlu0 0
    %32 = vperm.xlu0 %31, %v26
    %v33 = vpop.permute.xlu0 %32
    %36 = vset.pattern.permute.xlu0 0
    %37 = vperm.xlu0 %36, %v27
    %v38 = vpop.permute.xlu0 %37
    %41 = vset.pattern.permute.xlu0 0
    %42 = vperm.xlu0 %41, %v28
    %v43 = vpop.permute.xlu0 %42
    %46 = vset.pattern.permute.xlu0 0
    %47 = vperm.xlu0 %46, %v29
    %v48 = vpop.permute.xlu0 %47
    %vm50 = vcmask 31744
    %v52 = vsel %vm50, %v22, 0
    %v55 = vsel %vm50, %v23, 0
    %v58 = vsel %vm50, %v24, 0
    %v61 = vsel %vm50, %v25, 0
    %vm63 = vcmask 1043456
    %v65 = vsel %vm63, %v21, 0
    %67 = vmatprep.subr.mxu0 0.0
    %68 = vmatpush1.msra.mxu0 0.0
    %69 = vmatprep.subr.mxu0 0.0
    %70 = vmatpush1.msra.mxu0 0.0
    %71 = vmatprep.subr.mxu0 0.0
    %72 = vmatpush1.msra.mxu0 0.0
    %73 = vmatprep.subr.mxu0 0.0
    %74 = vmatpush1.msra.mxu0 0.0
    %75 = vmatprep.subr.mxu0 0.0
    %76 = vmatpush1.msra.mxu0 0.0
    %77 = vmatprep.subr.mxu0 0.0
    %78 = vmatpush1.msra.mxu0 0.0
    %79 = vmatprep.subr.mxu0 0.0
    %80 = vmatpush1.msra.mxu0 0.0
    %81 = vmatprep.subr.mxu0 0.0
    %82 = vmatpush1.msra.mxu0 0.0
    %83 = vmatprep.subr.mxu0 0.0
    %84 = vmatpush1.msra.mxu0 0.0
    %85 = vmatprep.subr.mxu0 0.0
    %86 = vmatpush1.msra.mxu0 0.0
    %87 = vmatprep.subr.mxu0 0.0
    %88 = vmatpush1.msra.mxu0 0.0
    %89 = vmatprep.subr.mxu0 0.0
    %90 = vmatpush1.msra.mxu0 0.0
    %91 = vmatprep.subr.mxu0 0.0
    %92 = vmatpush1.msra.mxu0 0.0
    %93 = vmatprep.subr.mxu0 0.0
    %94 = vmatpush1.msra.mxu0 0.0
    %95 = vmatprep.subr.mxu0 0.0
    %96 = vmatpush1.msra.mxu0 0.0
    %97 = vmatprep.subr.mxu0 0.0
    %98 = vmatpush1.msra.mxu0 %v65
    %99 = vmatprep.subr.mxu0 0.0
    %100 = vmatpush2.msra.mxu0 0.0
    %101 = vmatprep.subr.mxu0 0.0
    %102 = vmatpush2.msra.mxu0 0.0
    %103 = vmatprep.subr.mxu0 0.0
    %104 = vmatpush2.msra.mxu0 0.0
    %105 = vmatprep.subr.mxu0 0.0
    %106 = vmatpush2.msra.mxu0 0.0
    %107 = vmatprep.subr.mxu0 0.0
    %108 = vmatpush2.msra.mxu0 0.0
    %109 = vmatprep.subr.mxu0 0.0
    %110 = vmatpush2.msra.mxu0 0.0
    %111 = vmatprep.subr.mxu0 0.0
    %112 = vmatpush2.msra.mxu0 0.0
    %113 = vmatprep.subr.mxu0 0.0
    %114 = vmatpush2.msra.mxu0 0.0
    %115 = vmatprep.subr.mxu0 0.0
    %116 = vmatpush2.msra.mxu0 0.0
    %117 = vmatprep.subr.mxu0 0.0
    %118 = vmatpush2.msra.mxu0 0.0
    %119 = vmatprep.subr.mxu0 0.0
    %120 = vmatpush2.msra.mxu0 0.0
    %121 = vmatprep.subr.mxu0 0.0
    %122 = vmatpush2.msra.mxu0 0.0
    %123 = vmatprep.subr.mxu0 0.0
    %124 = vmatpush2.msra.mxu0 0.0
    %125 = vmatprep.subr.mxu0 0.0
    %126 = vmatpush2.msra.mxu0 0.0
    %127 = vmatprep.subr.mxu0 0.0
    %128 = vmatpush2.msra.mxu0 0.0
    %129 = vmatprep.subr.mxu0 0.0
    %130 = vmatpush2.msra.mxu0 0.0
    %131 = vmatprep.mubr.f32.mxu0 0.0
    %132 = vmatmul.mubr.f32.gmra.mxu0 %v52
    %v133 = vpop.f32.mrf.mxu0
    %v134 = vadd.f32 %v33, %v133
    %v135 = vpop.f32.mrf.mxu0
    %136 = vmatprep.mubr.f32.mxu0 0.0
    %137 = vmatmul.mubr.f32.gmra.mxu0 %v55
    %v138 = vpop.f32.mrf.mxu0
    %v139 = vadd.f32 %v38, %v138
    %v140 = vpop.f32.mrf.mxu0
    %141 = vmatprep.mubr.f32.mxu0 0.0
    %142 = vmatmul.mubr.f32.gmra.mxu0 %v58
    %v143 = vpop.f32.mrf.mxu0
    %v144 = vadd.f32 %v43, %v143
    %v145 = vpop.f32.mrf.mxu0
    %146 = vmatprep.mubr.f32.mxu0 0.0
    %147 = vmatmul.mubr.f32.gmra.mxu0 %v61
    %v148 = vpop.f32.mrf.mxu0
    %v149 = vadd.f32 %v48, %v148
    %v150 = vpop.f32.mrf.mxu0
    %151 = vdwg.mxu0
    %v152 = vmax.f32 %v134, 0.0
    %v153 = vmax.f32 %v139, 0.0
    %v154 = vmax.f32 %v144, 0.0
    %v155 = vmax.f32 %v149, 0.0
    %v156 = vld [vmem:[%s3] sm:$0x3]
    %v157 = vld [vmem:[%s4] sm:$0x3]
    %159 = vset.pattern.permute.xlu0 0
    %160 = vperm.xlu0 %159, %v157
    %v161 = vpop.permute.xlu0 %160
    %vm163 = vcmask 261120
    %v165 = vsel %vm163, %v156, 0
    %167 = vmatprep.subr.mxu0 0.0
    %168 = vmatpush1.msra.mxu0 0.0
    %169 = vmatprep.subr.mxu0 0.0
    %170 = vmatpush1.msra.mxu0 0.0
    %171 = vmatprep.subr.mxu0 0.0
    %172 = vmatpush1.msra.mxu0 0.0
    %173 = vmatprep.subr.mxu0 0.0
    %174 = vmatpush1.msra.mxu0 0.0
    %175 = vmatprep.subr.mxu0 0.0
    %176 = vmatpush1.msra.mxu0 0.0
    %177 = vmatprep.subr.mxu0 0.0
    %178 = vmatpush1.msra.mxu0 0.0
    %179 = vmatprep.subr.mxu0 0.0
    %180 = vmatpush1.msra.mxu0 0.0
    %181 = vmatprep.subr.mxu0 0.0
    %182 = vmatpush1.msra.mxu0 0.0
    %183 = vmatprep.subr.mxu0 0.0
    %184 = vmatpush1.msra.mxu0 0.0
    %185 = vmatprep.subr.mxu0 0.0
    %186 = vmatpush1.msra.mxu0 0.0
    %187 = vmatprep.subr.mxu0 0.0
    %188 = vmatpush1.msra.mxu0 0.0
    %189 = vmatprep.subr.mxu0 0.0
    %190 = vmatpush1.msra.mxu0 0.0
    %191 = vmatprep.subr.mxu0 0.0
    %192 = vmatpush1.msra.mxu0 %v155
    %193 = vmatprep.subr.mxu0 0.0
    %194 = vmatpush1.msra.mxu0 %v154
    %195 = vmatprep.subr.mxu0 0.0
    %196 = vmatpush1.msra.mxu0 %v153
    %197 = vmatprep.subr.mxu0 0.0
    %198 = vmatpush1.msra.mxu0 %v152
    %199 = vmatprep.subr.mxu0 0.0
    %200 = vmatpush2.msra.mxu0 0.0
    %201 = vmatprep.subr.mxu0 0.0
    %202 = vmatpush2.msra.mxu0 0.0
    %203 = vmatprep.subr.mxu0 0.0
    %204 = vmatpush2.msra.mxu0 0.0
    %205 = vmatprep.subr.mxu0 0.0
    %206 = vmatpush2.msra.mxu0 0.0
    %207 = vmatprep.subr.mxu0 0.0
    %208 = vmatpush2.msra.mxu0 0.0
    %209 = vmatprep.subr.mxu0 0.0
    %210 = vmatpush2.msra.mxu0 0.0
    %211 = vmatprep.subr.mxu0 0.0
    %212 = vmatpush2.msra.mxu0 0.0
    %213 = vmatprep.subr.mxu0 0.0
    %214 = vmatpush2.msra.mxu0 0.0
    %215 = vmatprep.subr.mxu0 0.0
    %216 = vmatpush2.msra.mxu0 0.0
    %217 = vmatprep.subr.mxu0 0.0
    %218 = vmatpush2.msra.mxu0 0.0
    %219 = vmatprep.subr.mxu0 0.0
    %220 = vmatpush2.msra.mxu0 0.0
    %221 = vmatprep.subr.mxu0 0.0
    %222 = vmatpush2.msra.mxu0 0.0
    %223 = vmatprep.subr.mxu0 0.0
    %224 = vmatpush2.msra.mxu0 0.0
    %225 = vmatprep.subr.mxu0 0.0
    %226 = vmatpush2.msra.mxu0 0.0
    %227 = vmatprep.subr.mxu0 0.0
    %228 = vmatpush2.msra.mxu0 0.0
    %229 = vmatprep.subr.mxu0 0.0
    %230 = vmatpush2.msra.mxu0 0.0
    %231 = vmatprep.mubr.f32.mxu0 0.0
    %232 = vmatmul.mubr.f32.gmra.mxu0 %v165
    %v233 = vpop.f32.mrf.mxu0
    %v234 = vadd.f32 %v161, %v233
    %v235 = vpop.f32.mrf.mxu0
    %236 = vdwg.mxu0
    %v237 = vtanh.pop %v234
    %v238 = vmul.f32 %v237, 2.0
    %239 = vst [vmem:[#allocation2] sm:$0x1] %v238
    %v240 = vmax.f32 %v234, 0.0
    %v241 = vand.u32 2147483647, %v234
    %v242 = vsub.f32 0.0, %v241
    %v243 = vmul.f32 %v242, 1.442695
    %v244 = vpow.pop %v243
    %v245 = vadd.f32 %v244, 1.0
    %v246 = vlog2.pop %v245
    %v247 = vmul.f32 %v246, 0.6931472
    %v248 = vmul.f32 -0.5, %v244
    %v249 = vadd.f32 %v248, 1.0
    %v250 = vmul.f32 %v249, %v244
    %v251 = vand.u32 2147483647, %v244
    %vm252 = vcmp.lt.f32.partialorder %v251, 0.0004427343
    %v253 = vsel %vm252, %v250, %v247
    %v254 = vadd.f32 %v240, %v253
    %255 = vst [vmem:[#allocation2] sm:$0x2] %v254
    // Predicated region
    $region22: #{tpu_custom_call.1} parent=1 // pred_check
      _
    $region23: #{tpu_custom_call.1} parent=1 // pred_check_branch
      %257 = sbr.rel (0) target = $region25
    $region24: #{tpu_custom_call.1} parent=1 // pred_region
      %s259 = ssub.s32 32, 32
      %260 = vsyncadd [#allocation3], %s259
      %s262 = sshll.u32 [#allocation2], 4
      %s263 = int_to_ptr.vmem [resolvable:$true] %s262
      %265 = dma.vmem_to_hbm [thread:$0]  %s263, 32, %s5, [#allocation3]
    $region25: #{tpu_custom_call.1} parent=1 // pred_fallthru
      _
    // Predicated region
    $region26: #{tpu_custom_call.1} parent=1 // pred_check
      _
    $region27: #{tpu_custom_call.1} parent=1 // pred_check_branch
      %267 = sbr.rel (0) target = $region29
    $region28: #{tpu_custom_call.1} parent=1 // pred_region
      %268 = dma.done [#allocation3], 32
    $region29: #{tpu_custom_call.1} parent=1 // pred_fallthru
      _
    %269 = vsyncpa [#allocation3], 1

</llo_original>
